<compile_context>
chip_gen: v7x
topology: tpu7x:2x2x1
jax: 0.10.0
libtpu: 0.0.40
codegen_flags: <defaults>
</compile_context>

<pallas_src>
import jax
import jax.numpy as jnp
from jax.experimental import pallas as pl
from jax.experimental.pallas import tpu as pltpu

IN_F, H1_F, H2_F, OUT_F = 2, 20, 10, 1


def mlp_kernel(x_ref, w1_ref, b1_ref, w2_ref, b2_ref, w3_ref, b3_ref, o_ref):
    # Feature-major tiles: x (2, TB), weights (out, in), biases (out, 1), out (1, TB).
    x = x_ref[...]                      # (2, TB)
    w1 = w1_ref[...]                    # (20, 2)
    w2 = w2_ref[...]                    # (10, 20)
    w3 = w3_ref[...]                    # (1, 10)
    tb = x.shape[1]

    # fc1 (K=2): two lane-dense VPU FMAs + bias + relu.
    h1 = w1[:, 0:1] * x[0:1, :] + w1[:, 1:2] * x[1:2, :] + b1_ref[...]
    h1 = jnp.maximum(h1, 0.0)           # (20, TB)

    # fc2 (K=20, N=10): unrolled column(weight) x row(activation) FMAs on the VPU.
    h2 = jnp.broadcast_to(b2_ref[...], (H2_F, tb))
    for k in range(H1_F):
        h2 = h2 + w2[:, k:k + 1] * h1[k:k + 1, :]
    h2 = jnp.maximum(h2, 0.0)           # (10, TB)

    # fc3 (K=10, N=1): lane-dense (1, TB) accumulation -> full-width output store.
    out = jnp.broadcast_to(b3_ref[...], (OUT_F, tb))
    for k in range(H2_F):
        out = out + w3[:, k:k + 1] * h2[k:k + 1, :]

    o_ref[...] = out.astype(o_ref.dtype)


def _round_up(n, m):
    return ((n + m - 1) // m) * m


def net_forward(x, params, tile_b=None):
    """x: (B, 2) float32 (PyTorch layout). params: PyTorch-layout weights (out,in), biases (out,).

    Returns (B, 1) float32, identical semantics to Net.forward.
    """
    B = x.shape[0]
    if tile_b is None:
        # Lane-aligned tile: small batches -> one tight tile; large batches -> 8K rows
        # per step (fits comfortably in scoped VMEM on v5e/v6e/v7x, amortizes per-step
        # overhead, leaves room for double buffering).
        tile_b = min(8192, _round_up(B, 128))
    num_blocks = pl.cdiv(B, tile_b)
    b_pad = num_blocks * tile_b

    # Layout plumbing (wrapper-side, not extra kernel compute): feature-major x, padded batch.
    x_fm = jnp.pad(x.astype(jnp.float32).T, ((0, 0), (0, b_pad - B)))   # (2, b_pad)

    w1 = params["w1"]                       # (20, 2)
    w2 = params["w2"]                       # (10, 20)
    w3 = params["w3"]                       # (1, 10)
    b1 = params["b1"].reshape(H1_F, 1)      # (20, 1)
    b2 = params["b2"].reshape(H2_F, 1)      # (10, 1)
    b3 = params["b3"].reshape(OUT_F, 1)     # (1, 1)

    out_fm = pl.pallas_call(
        mlp_kernel,
        out_shape=jax.ShapeDtypeStruct((OUT_F, b_pad), jnp.float32),
        grid=(num_blocks,),
        in_specs=[
            pl.BlockSpec((IN_F, tile_b), lambda i: (0, i)),     # x tile, streamed
            pl.BlockSpec((H1_F, IN_F), lambda i: (0, 0)),       # w1, resident
            pl.BlockSpec((H1_F, 1), lambda i: (0, 0)),          # b1, resident
            pl.BlockSpec((H2_F, H1_F), lambda i: (0, 0)),       # w2, resident
            pl.BlockSpec((H2_F, 1), lambda i: (0, 0)),          # b2, resident
            pl.BlockSpec((OUT_F, H2_F), lambda i: (0, 0)),      # w3, resident
            pl.BlockSpec((OUT_F, 1), lambda i: (0, 0)),         # b3, resident
        ],
        out_specs=pl.BlockSpec((OUT_F, tile_b), lambda i: (0, i)),
        compiler_params=pltpu.CompilerParams(
            dimension_semantics=("parallel",),
            vmem_limit_bytes=32 * 1024 * 1024,
        ),
    )(x_fm, w1, b1, w2, b2, w3, b3)

    return out_fm[:, :B].T                  # (B, 1)


def init_params(key):
    """Deterministic init mimicking PyTorch nn.Linear defaults (uniform +/- 1/sqrt(fan_in)).

    Weights stored PyTorch-style as (out_features, in_features); biases as (out_features,).
    """
    def linear(k, fan_in, fan_out):
        kw, kb = jax.random.split(k)
        bound = 1.0 / jnp.sqrt(float(fan_in))
        w = jax.random.uniform(kw, (fan_out, fan_in), jnp.float32, -bound, bound)
        b = jax.random.uniform(kb, (fan_out,), jnp.float32, -bound, bound)
        return w, b

    k1, k2, k3 = jax.random.split(key, 3)
    w1, b1 = linear(k1, IN_F, H1_F)
    w2, b2 = linear(k2, H1_F, H2_F)
    w3, b3 = linear(k3, H2_F, OUT_F)
    return {"w1": w1, "b1": b1, "w2": w2, "b2": b2, "w3": w3, "b3": b3}


def reference_forward(x, p):
    h1 = jnp.maximum(x @ p["w1"].T + p["b1"], 0.0)
    h2 = jnp.maximum(h1 @ p["w2"].T + p["b2"], 0.0)
    return h2 @ p["w3"].T + p["b3"]


if __name__ == "__main__":
    key = jax.random.PRNGKey(0)
    kx, kp = jax.random.split(key)

    B = 8
    x = jax.random.normal(kx, (B, IN_F), dtype=jnp.float32)
    params = init_params(kp)

    out = net_forward(x, params)
    out = jax.block_until_ready(out)

    ref = reference_forward(x, params)
    assert out.shape == (B, 1)
    assert jnp.allclose(out, ref, atol=1e-5, rtol=1e-5), (out, ref)

    print("KERNEL_OK")
</pallas_src>

<mosaic_0001>
module attributes {stable_mosaic.version = 11 : i64} {
  func.func @mlp_kernel(%arg0: i32, %arg1: memref<2x128xf32, #tpu.memory_space<vmem>>, %arg2: memref<20x2xf32, #tpu.memory_space<vmem>>, %arg3: memref<20x1xf32, #tpu.memory_space<vmem>>, %arg4: memref<10x20xf32, #tpu.memory_space<vmem>>, %arg5: memref<10x1xf32, #tpu.memory_space<vmem>>, %arg6: memref<1x10xf32, #tpu.memory_space<vmem>>, %arg7: memref<1x1xf32, #tpu.memory_space<vmem>>, %arg8: memref<1x128xf32, #tpu.memory_space<vmem>>) attributes {dimension_semantics = [#tpu.dimension_semantics<parallel>], iteration_bounds = array<i64: 1>, scalar_prefetch = 0 : i64, scratch_operands = 0 : i64, tpu.core_type = #tpu.core_type<tc>, window_params = [{transform_indices = @transform_0, window_bounds = array<i64: 2, 128>}, {pipeline_mode = #tpu.pipeline_mode<synchronous>, transform_indices = @transform_1, window_bounds = array<i64: 20, 2>}, {pipeline_mode = #tpu.pipeline_mode<synchronous>, transform_indices = @transform_2, window_bounds = array<i64: 20, 1>}, {pipeline_mode = #tpu.pipeline_mode<synchronous>, transform_indices = @transform_3, window_bounds = array<i64: 10, 20>}, {pipeline_mode = #tpu.pipeline_mode<synchronous>, transform_indices = @transform_4, window_bounds = array<i64: 10, 1>}, {pipeline_mode = #tpu.pipeline_mode<synchronous>, transform_indices = @transform_5, window_bounds = array<i64: 1, 10>}, {pipeline_mode = #tpu.pipeline_mode<synchronous>, transform_indices = @transform_6, window_bounds = array<i64: 1, 1>}, {transform_indices = @transform_7, window_bounds = array<i64: 1, 128>}]} {
    %c0 = arith.constant 0 : index
    %c0_0 = arith.constant 0 : index
    %0 = vector.load %arg1[%c0, %c0_0] : memref<2x128xf32, #tpu.memory_space<vmem>>, vector<2x128xf32>
    %c0_1 = arith.constant 0 : index
    %c0_2 = arith.constant 0 : index
    %1 = vector.load %arg2[%c0_1, %c0_2] : memref<20x2xf32, #tpu.memory_space<vmem>>, vector<20x2xf32>
    %c0_3 = arith.constant 0 : index
    %c0_4 = arith.constant 0 : index
    %2 = vector.load %arg4[%c0_3, %c0_4] : memref<10x20xf32, #tpu.memory_space<vmem>>, vector<10x20xf32>
    %c0_5 = arith.constant 0 : index
    %c0_6 = arith.constant 0 : index
    %3 = vector.load %arg6[%c0_5, %c0_6] : memref<1x10xf32, #tpu.memory_space<vmem>>, vector<1x10xf32>
    %4 = vector.extract_strided_slice %1 {offsets = [0, 0], sizes = [20, 1], strides = [1, 1]} : vector<20x2xf32> to vector<20x1xf32>
    %5 = vector.extract_strided_slice %0 {offsets = [0, 0], sizes = [1, 128], strides = [1, 1]} : vector<2x128xf32> to vector<1x128xf32>
    %6 = vector.broadcast %4 : vector<20x1xf32> to vector<20x128xf32>
    %7 = vector.broadcast %5 : vector<1x128xf32> to vector<20x128xf32>
    %8 = arith.mulf %6, %7 : vector<20x128xf32>
    %9 = vector.extract_strided_slice %1 {offsets = [0, 1], sizes = [20, 1], strides = [1, 1]} : vector<20x2xf32> to vector<20x1xf32>
    %10 = vector.extract_strided_slice %0 {offsets = [1, 0], sizes = [1, 128], strides = [1, 1]} : vector<2x128xf32> to vector<1x128xf32>
    %11 = vector.broadcast %9 : vector<20x1xf32> to vector<20x128xf32>
    %12 = vector.broadcast %10 : vector<1x128xf32> to vector<20x128xf32>
    %13 = arith.mulf %11, %12 : vector<20x128xf32>
    %14 = arith.addf %8, %13 : vector<20x128xf32>
    %c0_7 = arith.constant 0 : index
    %c0_8 = arith.constant 0 : index
    %15 = vector.load %arg3[%c0_7, %c0_8] : memref<20x1xf32, #tpu.memory_space<vmem>>, vector<20x1xf32>
    %16 = vector.broadcast %15 : vector<20x1xf32> to vector<20x128xf32>
    %17 = arith.addf %14, %16 : vector<20x128xf32>
    %cst = arith.constant 0.000000e+00 : f32
    %18 = vector.broadcast %cst : f32 to vector<20x128xf32>
    %19 = arith.maximumf %17, %18 : vector<20x128xf32>
    %c0_9 = arith.constant 0 : index
    %c0_10 = arith.constant 0 : index
    %20 = vector.load %arg5[%c0_9, %c0_10] : memref<10x1xf32, #tpu.memory_space<vmem>>, vector<10x1xf32>
    %21 = vector.shape_cast %20 : vector<10x1xf32> to vector<10x1xf32>
    %22 = vector.broadcast %21 : vector<10x1xf32> to vector<10x128xf32>
    %23 = vector.extract_strided_slice %2 {offsets = [0, 0], sizes = [10, 1], strides = [1, 1]} : vector<10x20xf32> to vector<10x1xf32>
    %24 = vector.extract_strided_slice %19 {offsets = [0, 0], sizes = [1, 128], strides = [1, 1]} : vector<20x128xf32> to vector<1x128xf32>
    %25 = vector.broadcast %23 : vector<10x1xf32> to vector<10x128xf32>
    %26 = vector.broadcast %24 : vector<1x128xf32> to vector<10x128xf32>
    %27 = arith.mulf %25, %26 : vector<10x128xf32>
    %28 = arith.addf %22, %27 : vector<10x128xf32>
    %29 = vector.extract_strided_slice %2 {offsets = [0, 1], sizes = [10, 1], strides = [1, 1]} : vector<10x20xf32> to vector<10x1xf32>
    %30 = vector.extract_strided_slice %19 {offsets = [1, 0], sizes = [1, 128], strides = [1, 1]} : vector<20x128xf32> to vector<1x128xf32>
    %31 = vector.broadcast %29 : vector<10x1xf32> to vector<10x128xf32>
    %32 = vector.broadcast %30 : vector<1x128xf32> to vector<10x128xf32>
    %33 = arith.mulf %31, %32 : vector<10x128xf32>
    %34 = arith.addf %28, %33 : vector<10x128xf32>
    %35 = vector.extract_strided_slice %2 {offsets = [0, 2], sizes = [10, 1], strides = [1, 1]} : vector<10x20xf32> to vector<10x1xf32>
    %36 = vector.extract_strided_slice %19 {offsets = [2, 0], sizes = [1, 128], strides = [1, 1]} : vector<20x128xf32> to vector<1x128xf32>
    %37 = vector.broadcast %35 : vector<10x1xf32> to vector<10x128xf32>
    %38 = vector.broadcast %36 : vector<1x128xf32> to vector<10x128xf32>
    %39 = arith.mulf %37, %38 : vector<10x128xf32>
    %40 = arith.addf %34, %39 : vector<10x128xf32>
    %41 = vector.extract_strided_slice %2 {offsets = [0, 3], sizes = [10, 1], strides = [1, 1]} : vector<10x20xf32> to vector<10x1xf32>
    %42 = vector.extract_strided_slice %19 {offsets = [3, 0], sizes = [1, 128], strides = [1, 1]} : vector<20x128xf32> to vector<1x128xf32>
    %43 = vector.broadcast %41 : vector<10x1xf32> to vector<10x128xf32>
    %44 = vector.broadcast %42 : vector<1x128xf32> to vector<10x128xf32>
    %45 = arith.mulf %43, %44 : vector<10x128xf32>
    %46 = arith.addf %40, %45 : vector<10x128xf32>
    %47 = vector.extract_strided_slice %2 {offsets = [0, 4], sizes = [10, 1], strides = [1, 1]} : vector<10x20xf32> to vector<10x1xf32>
    %48 = vector.extract_strided_slice %19 {offsets = [4, 0], sizes = [1, 128], strides = [1, 1]} : vector<20x128xf32> to vector<1x128xf32>
    %49 = vector.broadcast %47 : vector<10x1xf32> to vector<10x128xf32>
    %50 = vector.broadcast %48 : vector<1x128xf32> to vector<10x128xf32>
    %51 = arith.mulf %49, %50 : vector<10x128xf32>
    %52 = arith.addf %46, %51 : vector<10x128xf32>
    %53 = vector.extract_strided_slice %2 {offsets = [0, 5], sizes = [10, 1], strides = [1, 1]} : vector<10x20xf32> to vector<10x1xf32>
    %54 = vector.extract_strided_slice %19 {offsets = [5, 0], sizes = [1, 128], strides = [1, 1]} : vector<20x128xf32> to vector<1x128xf32>
    %55 = vector.broadcast %53 : vector<10x1xf32> to vector<10x128xf32>
    %56 = vector.broadcast %54 : vector<1x128xf32> to vector<10x128xf32>
    %57 = arith.mulf %55, %56 : vector<10x128xf32>
    %58 = arith.addf %52, %57 : vector<10x128xf32>
    %59 = vector.extract_strided_slice %2 {offsets = [0, 6], sizes = [10, 1], strides = [1, 1]} : vector<10x20xf32> to vector<10x1xf32>
    %60 = vector.extract_strided_slice %19 {offsets = [6, 0], sizes = [1, 128], strides = [1, 1]} : vector<20x128xf32> to vector<1x128xf32>
    %61 = vector.broadcast %59 : vector<10x1xf32> to vector<10x128xf32>
    %62 = vector.broadcast %60 : vector<1x128xf32> to vector<10x128xf32>
    %63 = arith.mulf %61, %62 : vector<10x128xf32>
    %64 = arith.addf %58, %63 : vector<10x128xf32>
    %65 = vector.extract_strided_slice %2 {offsets = [0, 7], sizes = [10, 1], strides = [1, 1]} : vector<10x20xf32> to vector<10x1xf32>
    %66 = vector.extract_strided_slice %19 {offsets = [7, 0], sizes = [1, 128], strides = [1, 1]} : vector<20x128xf32> to vector<1x128xf32>
    %67 = vector.broadcast %65 : vector<10x1xf32> to vector<10x128xf32>
    %68 = vector.broadcast %66 : vector<1x128xf32> to vector<10x128xf32>
    %69 = arith.mulf %67, %68 : vector<10x128xf32>
    %70 = arith.addf %64, %69 : vector<10x128xf32>
    %71 = vector.extract_strided_slice %2 {offsets = [0, 8], sizes = [10, 1], strides = [1, 1]} : vector<10x20xf32> to vector<10x1xf32>
    %72 = vector.extract_strided_slice %19 {offsets = [8, 0], sizes = [1, 128], strides = [1, 1]} : vector<20x128xf32> to vector<1x128xf32>
    %73 = vector.broadcast %71 : vector<10x1xf32> to vector<10x128xf32>
    %74 = vector.broadcast %72 : vector<1x128xf32> to vector<10x128xf32>
    %75 = arith.mulf %73, %74 : vector<10x128xf32>
    %76 = arith.addf %70, %75 : vector<10x128xf32>
    %77 = vector.extract_strided_slice %2 {offsets = [0, 9], sizes = [10, 1], strides = [1, 1]} : vector<10x20xf32> to vector<10x1xf32>
    %78 = vector.extract_strided_slice %19 {offsets = [9, 0], sizes = [1, 128], strides = [1, 1]} : vector<20x128xf32> to vector<1x128xf32>
    %79 = vector.broadcast %77 : vector<10x1xf32> to vector<10x128xf32>
    %80 = vector.broadcast %78 : vector<1x128xf32> to vector<10x128xf32>
    %81 = arith.mulf %79, %80 : vector<10x128xf32>
    %82 = arith.addf %76, %81 : vector<10x128xf32>
    %83 = vector.extract_strided_slice %2 {offsets = [0, 10], sizes = [10, 1], strides = [1, 1]} : vector<10x20xf32> to vector<10x1xf32>
    %84 = vector.extract_strided_slice %19 {offsets = [10, 0], sizes = [1, 128], strides = [1, 1]} : vector<20x128xf32> to vector<1x128xf32>
    %85 = vector.broadcast %83 : vector<10x1xf32> to vector<10x128xf32>
    %86 = vector.broadcast %84 : vector<1x128xf32> to vector<10x128xf32>
    %87 = arith.mulf %85, %86 : vector<10x128xf32>
    %88 = arith.addf %82, %87 : vector<10x128xf32>
    %89 = vector.extract_strided_slice %2 {offsets = [0, 11], sizes = [10, 1], strides = [1, 1]} : vector<10x20xf32> to vector<10x1xf32>
    %90 = vector.extract_strided_slice %19 {offsets = [11, 0], sizes = [1, 128], strides = [1, 1]} : vector<20x128xf32> to vector<1x128xf32>
    %91 = vector.broadcast %89 : vector<10x1xf32> to vector<10x128xf32>
    %92 = vector.broadcast %90 : vector<1x128xf32> to vector<10x128xf32>
    %93 = arith.mulf %91, %92 : vector<10x128xf32>
    %94 = arith.addf %88, %93 : vector<10x128xf32>
    %95 = vector.extract_strided_slice %2 {offsets = [0, 12], sizes = [10, 1], strides = [1, 1]} : vector<10x20xf32> to vector<10x1xf32>
    %96 = vector.extract_strided_slice %19 {offsets = [12, 0], sizes = [1, 128], strides = [1, 1]} : vector<20x128xf32> to vector<1x128xf32>
    %97 = vector.broadcast %95 : vector<10x1xf32> to vector<10x128xf32>
    %98 = vector.broadcast %96 : vector<1x128xf32> to vector<10x128xf32>
    %99 = arith.mulf %97, %98 : vector<10x128xf32>
    %100 = arith.addf %94, %99 : vector<10x128xf32>
    %101 = vector.extract_strided_slice %2 {offsets = [0, 13], sizes = [10, 1], strides = [1, 1]} : vector<10x20xf32> to vector<10x1xf32>
    %102 = vector.extract_strided_slice %19 {offsets = [13, 0], sizes = [1, 128], strides = [1, 1]} : vector<20x128xf32> to vector<1x128xf32>
    %103 = vector.broadcast %101 : vector<10x1xf32> to vector<10x128xf32>
    %104 = vector.broadcast %102 : vector<1x128xf32> to vector<10x128xf32>
    %105 = arith.mulf %103, %104 : vector<10x128xf32>
    %106 = arith.addf %100, %105 : vector<10x128xf32>
    %107 = vector.extract_strided_slice %2 {offsets = [0, 14], sizes = [10, 1], strides = [1, 1]} : vector<10x20xf32> to vector<10x1xf32>
    %108 = vector.extract_strided_slice %19 {offsets = [14, 0], sizes = [1, 128], strides = [1, 1]} : vector<20x128xf32> to vector<1x128xf32>
    %109 = vector.broadcast %107 : vector<10x1xf32> to vector<10x128xf32>
    %110 = vector.broadcast %108 : vector<1x128xf32> to vector<10x128xf32>
    %111 = arith.mulf %109, %110 : vector<10x128xf32>
    %112 = arith.addf %106, %111 : vector<10x128xf32>
    %113 = vector.extract_strided_slice %2 {offsets = [0, 15], sizes = [10, 1], strides = [1, 1]} : vector<10x20xf32> to vector<10x1xf32>
    %114 = vector.extract_strided_slice %19 {offsets = [15, 0], sizes = [1, 128], strides = [1, 1]} : vector<20x128xf32> to vector<1x128xf32>
    %115 = vector.broadcast %113 : vector<10x1xf32> to vector<10x128xf32>
    %116 = vector.broadcast %114 : vector<1x128xf32> to vector<10x128xf32>
    %117 = arith.mulf %115, %116 : vector<10x128xf32>
    %118 = arith.addf %112, %117 : vector<10x128xf32>
    %119 = vector.extract_strided_slice %2 {offsets = [0, 16], sizes = [10, 1], strides = [1, 1]} : vector<10x20xf32> to vector<10x1xf32>
    %120 = vector.extract_strided_slice %19 {offsets = [16, 0], sizes = [1, 128], strides = [1, 1]} : vector<20x128xf32> to vector<1x128xf32>
    %121 = vector.broadcast %119 : vector<10x1xf32> to vector<10x128xf32>
    %122 = vector.broadcast %120 : vector<1x128xf32> to vector<10x128xf32>
    %123 = arith.mulf %121, %122 : vector<10x128xf32>
    %124 = arith.addf %118, %123 : vector<10x128xf32>
    %125 = vector.extract_strided_slice %2 {offsets = [0, 17], sizes = [10, 1], strides = [1, 1]} : vector<10x20xf32> to vector<10x1xf32>
    %126 = vector.extract_strided_slice %19 {offsets = [17, 0], sizes = [1, 128], strides = [1, 1]} : vector<20x128xf32> to vector<1x128xf32>
    %127 = vector.broadcast %125 : vector<10x1xf32> to vector<10x128xf32>
    %128 = vector.broadcast %126 : vector<1x128xf32> to vector<10x128xf32>
    %129 = arith.mulf %127, %128 : vector<10x128xf32>
    %130 = arith.addf %124, %129 : vector<10x128xf32>
    %131 = vector.extract_strided_slice %2 {offsets = [0, 18], sizes = [10, 1], strides = [1, 1]} : vector<10x20xf32> to vector<10x1xf32>
    %132 = vector.extract_strided_slice %19 {offsets = [18, 0], sizes = [1, 128], strides = [1, 1]} : vector<20x128xf32> to vector<1x128xf32>
    %133 = vector.broadcast %131 : vector<10x1xf32> to vector<10x128xf32>
    %134 = vector.broadcast %132 : vector<1x128xf32> to vector<10x128xf32>
    %135 = arith.mulf %133, %134 : vector<10x128xf32>
    %136 = arith.addf %130, %135 : vector<10x128xf32>
    %137 = vector.extract_strided_slice %2 {offsets = [0, 19], sizes = [10, 1], strides = [1, 1]} : vector<10x20xf32> to vector<10x1xf32>
    %138 = vector.extract_strided_slice %19 {offsets = [19, 0], sizes = [1, 128], strides = [1, 1]} : vector<20x128xf32> to vector<1x128xf32>
    %139 = vector.broadcast %137 : vector<10x1xf32> to vector<10x128xf32>
    %140 = vector.broadcast %138 : vector<1x128xf32> to vector<10x128xf32>
    %141 = arith.mulf %139, %140 : vector<10x128xf32>
    %142 = arith.addf %136, %141 : vector<10x128xf32>
    %cst_11 = arith.constant 0.000000e+00 : f32
    %143 = vector.broadcast %cst_11 : f32 to vector<10x128xf32>
    %144 = arith.maximumf %142, %143 : vector<10x128xf32>
    %c0_12 = arith.constant 0 : index
    %c0_13 = arith.constant 0 : index
    %145 = vector.load %arg7[%c0_12, %c0_13] : memref<1x1xf32, #tpu.memory_space<vmem>>, vector<1x1xf32>
    %146 = vector.shape_cast %145 : vector<1x1xf32> to vector<1x1xf32>
    %147 = vector.broadcast %146 : vector<1x1xf32> to vector<1x128xf32>
    %148 = vector.extract_strided_slice %3 {offsets = [0, 0], sizes = [1, 1], strides = [1, 1]} : vector<1x10xf32> to vector<1x1xf32>
    %149 = vector.extract_strided_slice %144 {offsets = [0, 0], sizes = [1, 128], strides = [1, 1]} : vector<10x128xf32> to vector<1x128xf32>
    %150 = vector.broadcast %148 : vector<1x1xf32> to vector<1x128xf32>
    %151 = arith.mulf %150, %149 : vector<1x128xf32>
    %152 = arith.addf %147, %151 : vector<1x128xf32>
    %153 = vector.extract_strided_slice %3 {offsets = [0, 1], sizes = [1, 1], strides = [1, 1]} : vector<1x10xf32> to vector<1x1xf32>
    %154 = vector.extract_strided_slice %144 {offsets = [1, 0], sizes = [1, 128], strides = [1, 1]} : vector<10x128xf32> to vector<1x128xf32>
    %155 = vector.broadcast %153 : vector<1x1xf32> to vector<1x128xf32>
    %156 = arith.mulf %155, %154 : vector<1x128xf32>
    %157 = arith.addf %152, %156 : vector<1x128xf32>
    %158 = vector.extract_strided_slice %3 {offsets = [0, 2], sizes = [1, 1], strides = [1, 1]} : vector<1x10xf32> to vector<1x1xf32>
    %159 = vector.extract_strided_slice %144 {offsets = [2, 0], sizes = [1, 128], strides = [1, 1]} : vector<10x128xf32> to vector<1x128xf32>
    %160 = vector.broadcast %158 : vector<1x1xf32> to vector<1x128xf32>
    %161 = arith.mulf %160, %159 : vector<1x128xf32>
    %162 = arith.addf %157, %161 : vector<1x128xf32>
    %163 = vector.extract_strided_slice %3 {offsets = [0, 3], sizes = [1, 1], strides = [1, 1]} : vector<1x10xf32> to vector<1x1xf32>
    %164 = vector.extract_strided_slice %144 {offsets = [3, 0], sizes = [1, 128], strides = [1, 1]} : vector<10x128xf32> to vector<1x128xf32>
    %165 = vector.broadcast %163 : vector<1x1xf32> to vector<1x128xf32>
    %166 = arith.mulf %165, %164 : vector<1x128xf32>
    %167 = arith.addf %162, %166 : vector<1x128xf32>
    %168 = vector.extract_strided_slice %3 {offsets = [0, 4], sizes = [1, 1], strides = [1, 1]} : vector<1x10xf32> to vector<1x1xf32>
    %169 = vector.extract_strided_slice %144 {offsets = [4, 0], sizes = [1, 128], strides = [1, 1]} : vector<10x128xf32> to vector<1x128xf32>
    %170 = vector.broadcast %168 : vector<1x1xf32> to vector<1x128xf32>
    %171 = arith.mulf %170, %169 : vector<1x128xf32>
    %172 = arith.addf %167, %171 : vector<1x128xf32>
    %173 = vector.extract_strided_slice %3 {offsets = [0, 5], sizes = [1, 1], strides = [1, 1]} : vector<1x10xf32> to vector<1x1xf32>
    %174 = vector.extract_strided_slice %144 {offsets = [5, 0], sizes = [1, 128], strides = [1, 1]} : vector<10x128xf32> to vector<1x128xf32>
    %175 = vector.broadcast %173 : vector<1x1xf32> to vector<1x128xf32>
    %176 = arith.mulf %175, %174 : vector<1x128xf32>
    %177 = arith.addf %172, %176 : vector<1x128xf32>
    %178 = vector.extract_strided_slice %3 {offsets = [0, 6], sizes = [1, 1], strides = [1, 1]} : vector<1x10xf32> to vector<1x1xf32>
    %179 = vector.extract_strided_slice %144 {offsets = [6, 0], sizes = [1, 128], strides = [1, 1]} : vector<10x128xf32> to vector<1x128xf32>
    %180 = vector.broadcast %178 : vector<1x1xf32> to vector<1x128xf32>
    %181 = arith.mulf %180, %179 : vector<1x128xf32>
    %182 = arith.addf %177, %181 : vector<1x128xf32>
    %183 = vector.extract_strided_slice %3 {offsets = [0, 7], sizes = [1, 1], strides = [1, 1]} : vector<1x10xf32> to vector<1x1xf32>
    %184 = vector.extract_strided_slice %144 {offsets = [7, 0], sizes = [1, 128], strides = [1, 1]} : vector<10x128xf32> to vector<1x128xf32>
    %185 = vector.broadcast %183 : vector<1x1xf32> to vector<1x128xf32>
    %186 = arith.mulf %185, %184 : vector<1x128xf32>
    %187 = arith.addf %182, %186 : vector<1x128xf32>
    %188 = vector.extract_strided_slice %3 {offsets = [0, 8], sizes = [1, 1], strides = [1, 1]} : vector<1x10xf32> to vector<1x1xf32>
    %189 = vector.extract_strided_slice %144 {offsets = [8, 0], sizes = [1, 128], strides = [1, 1]} : vector<10x128xf32> to vector<1x128xf32>
    %190 = vector.broadcast %188 : vector<1x1xf32> to vector<1x128xf32>
    %191 = arith.mulf %190, %189 : vector<1x128xf32>
    %192 = arith.addf %187, %191 : vector<1x128xf32>
    %193 = vector.extract_strided_slice %3 {offsets = [0, 9], sizes = [1, 1], strides = [1, 1]} : vector<1x10xf32> to vector<1x1xf32>
    %194 = vector.extract_strided_slice %144 {offsets = [9, 0], sizes = [1, 128], strides = [1, 1]} : vector<10x128xf32> to vector<1x128xf32>
    %195 = vector.broadcast %193 : vector<1x1xf32> to vector<1x128xf32>
    %196 = arith.mulf %195, %194 : vector<1x128xf32>
    %197 = arith.addf %192, %196 : vector<1x128xf32>
    %c0_14 = arith.constant 0 : index
    %c0_15 = arith.constant 0 : index
    %198 = vector.load %arg8[%c0_14, %c0_15] : memref<1x128xf32, #tpu.memory_space<vmem>>, vector<1x128xf32>
    tpu.vector_store %arg8[%c0_14, %c0_15], %197 {strides = array<i32>} : memref<1x128xf32, #tpu.memory_space<vmem>>, vector<1x128xf32>,
    return
  }
  func.func @transform_0(%arg0: i32) -> (i32, i32) {
    %c0_i32 = arith.constant 0 : i32
    %c0_i32_0 = arith.constant 0 : i32
    return %c0_i32, %arg0 : i32, i32
  }
  func.func @transform_1(%arg0: i32) -> (i32, i32) {
    %c0_i32 = arith.constant 0 : i32
    %c0_i32_0 = arith.constant 0 : i32
    %c0_i32_1 = arith.constant 0 : i32
    return %c0_i32, %c0_i32_0 : i32, i32
  }
  func.func @transform_2(%arg0: i32) -> (i32, i32) {
    %c0_i32 = arith.constant 0 : i32
    %c0_i32_0 = arith.constant 0 : i32
    %c0_i32_1 = arith.constant 0 : i32
    return %c0_i32, %c0_i32_0 : i32, i32
  }
  func.func @transform_3(%arg0: i32) -> (i32, i32) {
    %c0_i32 = arith.constant 0 : i32
    %c0_i32_0 = arith.constant 0 : i32
    %c0_i32_1 = arith.constant 0 : i32
    return %c0_i32, %c0_i32_0 : i32, i32
  }
  func.func @transform_4(%arg0: i32) -> (i32, i32) {
    %c0_i32 = arith.constant 0 : i32
    %c0_i32_0 = arith.constant 0 : i32
    %c0_i32_1 = arith.constant 0 : i32
    return %c0_i32, %c0_i32_0 : i32, i32
  }
  func.func @transform_5(%arg0: i32) -> (i32, i32) {
    %c0_i32 = arith.constant 0 : i32
    %c0_i32_0 = arith.constant 0 : i32
    %c0_i32_1 = arith.constant 0 : i32
    return %c0_i32, %c0_i32_0 : i32, i32
  }
  func.func @transform_6(%arg0: i32) -> (i32, i32) {
    %c0_i32 = arith.constant 0 : i32
    %c0_i32_0 = arith.constant 0 : i32
    %c0_i32_1 = arith.constant 0 : i32
    return %c0_i32, %c0_i32_0 : i32, i32
  }
  func.func @transform_7(%arg0: i32) -> (i32, i32) {
    %c0_i32 = arith.constant 0 : i32
    %c0_i32_0 = arith.constant 0 : i32
    return %c0_i32, %arg0 : i32, i32
  }
}

</mosaic_0001>

<llo_original>
// kernel: tpu_custom_call.1
$region0: #{tpu_custom_call.1}
  #allocation0 [shape = 'u32[]', space=smem, size = 0x4, offset = 0x4, fixed_abs, tag = 'smem constant byte address 0x4 - core index']
  #allocation1 [shape = 'u32[144,128]{1,0:T(1,128)}', space=vmem, size = 0x12000, scoped, tag = 'internal scratch']
  #allocation2 [shape = 'f32[1,1]{1,0:T(1,128)S(1)}', space=vmem, size = 0x200, scoped, tag = 'scoped memory for tpu_custom_call.1']
  %s0 = inlined_call_operand.vmem [shape: f32[2,128], index: 0, kind: input, shape index: {}]
  %s1 = inlined_call_operand.vmem [shape: f32[20,2], index: 1, kind: input, shape index: {}]
  %s2 = inlined_call_operand.vmem [shape: f32[20,1], index: 2, kind: input, shape index: {}]
  %s3 = inlined_call_operand.vmem [shape: f32[10,20], index: 3, kind: input, shape index: {}]
  %s4 = inlined_call_operand.vmem [shape: f32[10,1], index: 4, kind: input, shape index: {}]
  %s5 = inlined_call_operand.vmem [shape: f32[1,10], index: 5, kind: input, shape index: {}]
  %s6 = inlined_call_operand.<no memory space> [shape: f32[1,1], index: 6, kind: input, shape index: {}]
  %s7 = inlined_call_operand.hbm [shape: f32[1,128], index: 7, kind: output, shape index: {}]
  %s8 = sld [smem:[#allocation0]]
  $region38: #{tpu_custom_call.1} parent=0
    _
  %s10 = ssub.s32 1, %s8
  %s11 = scalar_select 0, %s10, %s8
  %v12 = vstv %s6
  %13 = vst [vmem:[#allocation2] sm:$0x1] %v12
  $region1: #{tpu_custom_call.1} parent=0
    #allocation3 [shape = 'u8[512]{0}', space=vmem, size = 0x400, scoped, tag = 'output window, operand 0, single buffered']
    #allocation4 [shape = 's32[1]{0}', space=sflag, size = 0x4, scoped, tag = 'scoped memory for tpu_custom_call.1']
    %14 = vsyncpa [#allocation4], 0
    // Predicated region
    $region2: #{tpu_custom_call.1} parent=1 // pred_check
      _
    $region3: #{tpu_custom_call.1} parent=1 // pred_check_branch
      %16 = sbr.rel (0) target = $region5
    $region4: #{tpu_custom_call.1} parent=1 // pred_region
      _
    $region5: #{tpu_custom_call.1} parent=1 // pred_fallthru
      _
    // Predicated region
    $region6: #{tpu_custom_call.1} parent=1 // pred_check
      _
    $region7: #{tpu_custom_call.1} parent=1 // pred_check_branch
      %18 = sbr.rel (0) target = $region9
    $region8: #{tpu_custom_call.1} parent=1 // pred_region
      _
    $region9: #{tpu_custom_call.1} parent=1 // pred_fallthru
      _
    // Predicated region
    $region10: #{tpu_custom_call.1} parent=1 // pred_check
      _
    $region11: #{tpu_custom_call.1} parent=1 // pred_check_branch
      %20 = sbr.rel (0) target = $region13
    $region12: #{tpu_custom_call.1} parent=1 // pred_region
      _
    $region13: #{tpu_custom_call.1} parent=1 // pred_fallthru
      _
    // Predicated region
    $region14: #{tpu_custom_call.1} parent=1 // pred_check
      _
    $region15: #{tpu_custom_call.1} parent=1 // pred_check_branch
      %22 = sbr.rel (0) target = $region17
    $region16: #{tpu_custom_call.1} parent=1 // pred_region
      _
    $region17: #{tpu_custom_call.1} parent=1 // pred_fallthru
      _
    // Predicated region
    $region18: #{tpu_custom_call.1} parent=1 // pred_check
      _
    $region19: #{tpu_custom_call.1} parent=1 // pred_check_branch
      %24 = sbr.rel (0) target = $region21
    $region20: #{tpu_custom_call.1} parent=1 // pred_region
      _
    $region21: #{tpu_custom_call.1} parent=1 // pred_fallthru
      _
    // Predicated region
    $region22: #{tpu_custom_call.1} parent=1 // pred_check
      _
    $region23: #{tpu_custom_call.1} parent=1 // pred_check_branch
      %26 = sbr.rel (0) target = $region25
    $region24: #{tpu_custom_call.1} parent=1 // pred_region
      _
    $region25: #{tpu_custom_call.1} parent=1 // pred_fallthru
      _
    // Predicated region
    $region26: #{tpu_custom_call.1} parent=1 // pred_check
      _
    $region27: #{tpu_custom_call.1} parent=1 // pred_check_branch
      %28 = sbr.rel (0) target = $region29
    $region28: #{tpu_custom_call.1} parent=1 // pred_region
      _
    $region29: #{tpu_custom_call.1} parent=1 // pred_fallthru
      _
    %v29 = vld [vmem:[%s0] sm:$0x3]
    %v30 = vld [vmem:[%s1] sm:$0xff]
    %v31 = vld [vmem:[%s1 + $0x8] sm:$0xff]
    %v32 = vld [vmem:[%s1 + $0x10] sm:$0xf]
    %v33 = vld [vmem:[%s3] sm:$0xff]
    %v34 = vld [vmem:[%s3 + $0x8] sm:$0x3]
    %v35 = vld [vmem:[%s5] sm:$0x1]
    %37 = vset.pattern.permute.xlu0 0
    %38 = vperm.xlu0 %37, %v30
    %v39 = vpop.permute.xlu0 %38
    %42 = vset.pattern.permute.xlu0 0
    %43 = vperm.xlu0 %42, %v31
    %v44 = vpop.permute.xlu0 %43
    %47 = vset.pattern.permute.xlu0 0
    %48 = vperm.xlu0 %47, %v32
    %v49 = vpop.permute.xlu0 %48
    %v51 = vlaneseq
    %v52 = vshrl.u32 %v51, 7
    %v53 = vsub.s32 0, %v52
    %v54 = vrot.slane %v29, %v53
    %v55 = vmul.f32 %v39, %v54
    %v56 = vmul.f32 %v44, %v54
    %v57 = vmul.f32 %v49, %v54
    %58 = vset.pattern.permute.xlu0 1
    %59 = vperm.xlu0 %58, %v30
    %v60 = vpop.permute.xlu0 %59
    %62 = vset.pattern.permute.xlu0 1
    %63 = vperm.xlu0 %62, %v31
    %v64 = vpop.permute.xlu0 %63
    %66 = vset.pattern.permute.xlu0 1
    %67 = vperm.xlu0 %66, %v32
    %v68 = vpop.permute.xlu0 %67
    %v70 = vlaneseq
    %v71 = vshrl.u32 %v70, 7
    %v72 = vsub.s32 1, %v71
    %v73 = vrot.slane %v29, %v72
    %v74 = vmul.f32 %v60, %v73
    %v75 = vmul.f32 %v64, %v73
    %v76 = vmul.f32 %v68, %v73
    %v77 = vadd.f32 %v55, %v74
    %v78 = vadd.f32 %v56, %v75
    %v79 = vadd.f32 %v57, %v76
    %v80 = vld [vmem:[%s2] sm:$0xff]
    %v81 = vld [vmem:[%s2 + $0x8] sm:$0xff]
    %v82 = vld [vmem:[%s2 + $0x10] sm:$0xf]
    %84 = vset.pattern.permute.xlu0 0
    %85 = vperm.xlu0 %84, %v80
    %v86 = vpop.permute.xlu0 %85
    %89 = vset.pattern.permute.xlu0 0
    %90 = vperm.xlu0 %89, %v81
    %v91 = vpop.permute.xlu0 %90
    %94 = vset.pattern.permute.xlu0 0
    %95 = vperm.xlu0 %94, %v82
    %v96 = vpop.permute.xlu0 %95
    %v98 = vadd.f32 %v77, %v86
    %v99 = vadd.f32 %v78, %v91
    %v100 = vadd.f32 %v79, %v96
    %v101 = vmax.f32 %v98, 0.0
    %v102 = vmax.f32 %v99, 0.0
    %v103 = vmax.f32 %v100, 0.0
    %v104 = vld [vmem:[%s4] sm:$0xff]
    %v105 = vld [vmem:[%s4 + $0x8] sm:$0x3]
    %107 = vset.pattern.permute.xlu0 0
    %108 = vperm.xlu0 %107, %v104
    %v109 = vpop.permute.xlu0 %108
    %112 = vset.pattern.permute.xlu0 0
    %113 = vperm.xlu0 %112, %v105
    %v114 = vpop.permute.xlu0 %113
    %117 = vset.pattern.permute.xlu0 0
    %118 = vperm.xlu0 %117, %v33
    %v119 = vpop.permute.xlu0 %118
    %122 = vset.pattern.permute.xlu0 0
    %123 = vperm.xlu0 %122, %v34
    %v124 = vpop.permute.xlu0 %123
    %v126 = vlaneseq
    %v127 = vshrl.u32 %v126, 7
    %v128 = vsub.s32 0, %v127
    %v129 = vrot.slane %v101, %v128
    %v130 = vmul.f32 %v119, %v129
    %v131 = vmul.f32 %v124, %v129
    %v132 = vadd.f32 %v109, %v130
    %v133 = vadd.f32 %v114, %v131
    %134 = vset.pattern.permute.xlu0 1
    %135 = vperm.xlu0 %134, %v33
    %v136 = vpop.permute.xlu0 %135
    %138 = vset.pattern.permute.xlu0 1
    %139 = vperm.xlu0 %138, %v34
    %v140 = vpop.permute.xlu0 %139
    %v142 = vlaneseq
    %v143 = vshrl.u32 %v142, 7
    %v144 = vsub.s32 1, %v143
    %v145 = vrot.slane %v101, %v144
    %v146 = vmul.f32 %v136, %v145
    %v147 = vmul.f32 %v140, %v145
    %v148 = vadd.f32 %v132, %v146
    %v149 = vadd.f32 %v133, %v147
    %150 = vset.pattern.permute.xlu0 2
    %151 = vperm.xlu0 %150, %v33
    %v152 = vpop.permute.xlu0 %151
    %154 = vset.pattern.permute.xlu0 2
    %155 = vperm.xlu0 %154, %v34
    %v156 = vpop.permute.xlu0 %155
    %v158 = vlaneseq
    %v159 = vshrl.u32 %v158, 7
    %v160 = vsub.s32 2, %v159
    %v161 = vrot.slane %v101, %v160
    %v162 = vmul.f32 %v152, %v161
    %v163 = vmul.f32 %v156, %v161
    %v164 = vadd.f32 %v148, %v162
    %v165 = vadd.f32 %v149, %v163
    %166 = vset.pattern.permute.xlu0 3
    %167 = vperm.xlu0 %166, %v33
    %v168 = vpop.permute.xlu0 %167
    %170 = vset.pattern.permute.xlu0 3
    %171 = vperm.xlu0 %170, %v34
    %v172 = vpop.permute.xlu0 %171
    %v174 = vlaneseq
    %v175 = vshrl.u32 %v174, 7
    %v176 = vsub.s32 3, %v175
    %v177 = vrot.slane %v101, %v176
    %v178 = vmul.f32 %v168, %v177
    %v179 = vmul.f32 %v172, %v177
    %v180 = vadd.f32 %v164, %v178
    %v181 = vadd.f32 %v165, %v179
    %182 = vset.pattern.permute.xlu0 4
    %183 = vperm.xlu0 %182, %v33
    %v184 = vpop.permute.xlu0 %183
    %186 = vset.pattern.permute.xlu0 4
    %187 = vperm.xlu0 %186, %v34
    %v188 = vpop.permute.xlu0 %187
    %v190 = vlaneseq
    %v191 = vshrl.u32 %v190, 7
    %v192 = vsub.s32 4, %v191
    %v193 = vrot.slane %v101, %v192
    %v194 = vmul.f32 %v184, %v193
    %v195 = vmul.f32 %v188, %v193
    %v196 = vadd.f32 %v180, %v194
    %v197 = vadd.f32 %v181, %v195
    %198 = vset.pattern.permute.xlu0 5
    %199 = vperm.xlu0 %198, %v33
    %v200 = vpop.permute.xlu0 %199
    %202 = vset.pattern.permute.xlu0 5
    %203 = vperm.xlu0 %202, %v34
    %v204 = vpop.permute.xlu0 %203
    %v206 = vlaneseq
    %v207 = vshrl.u32 %v206, 7
    %v208 = vsub.s32 5, %v207
    %v209 = vrot.slane %v101, %v208
    %v210 = vmul.f32 %v200, %v209
    %v211 = vmul.f32 %v204, %v209
    %v212 = vadd.f32 %v196, %v210
    %v213 = vadd.f32 %v197, %v211
    %214 = vset.pattern.permute.xlu0 6
    %215 = vperm.xlu0 %214, %v33
    %v216 = vpop.permute.xlu0 %215
    %218 = vset.pattern.permute.xlu0 6
    %219 = vperm.xlu0 %218, %v34
    %v220 = vpop.permute.xlu0 %219
    %v222 = vlaneseq
    %v223 = vshrl.u32 %v222, 7
    %v224 = vsub.s32 6, %v223
    %v225 = vrot.slane %v101, %v224
    %v226 = vmul.f32 %v216, %v225
    %v227 = vmul.f32 %v220, %v225
    %v228 = vadd.f32 %v212, %v226
    %v229 = vadd.f32 %v213, %v227
    %230 = vset.pattern.permute.xlu0 7
    %231 = vperm.xlu0 %230, %v33
    %v232 = vpop.permute.xlu0 %231
    %234 = vset.pattern.permute.xlu0 7
    %235 = vperm.xlu0 %234, %v34
    %v236 = vpop.permute.xlu0 %235
    %v238 = vlaneseq
    %v239 = vshrl.u32 %v238, 7
    %v240 = vsub.s32 7, %v239
    %v241 = vrot.slane %v101, %v240
    %v242 = vmul.f32 %v232, %v241
    %v243 = vmul.f32 %v236, %v241
    %v244 = vadd.f32 %v228, %v242
    %v245 = vadd.f32 %v229, %v243
    %246 = vset.pattern.permute.xlu0 8
    %247 = vperm.xlu0 %246, %v33
    %v248 = vpop.permute.xlu0 %247
    %250 = vset.pattern.permute.xlu0 8
    %251 = vperm.xlu0 %250, %v34
    %v252 = vpop.permute.xlu0 %251
    %v254 = vlaneseq
    %v255 = vshrl.u32 %v254, 7
    %v256 = vsub.s32 0, %v255
    %v257 = vrot.slane %v102, %v256
    %v258 = vmul.f32 %v248, %v257
    %v259 = vmul.f32 %v252, %v257
    %v260 = vadd.f32 %v244, %v258
    %v261 = vadd.f32 %v245, %v259
    %262 = vset.pattern.permute.xlu0 9
    %263 = vperm.xlu0 %262, %v33
    %v264 = vpop.permute.xlu0 %263
    %266 = vset.pattern.permute.xlu0 9
    %267 = vperm.xlu0 %266, %v34
    %v268 = vpop.permute.xlu0 %267
    %v270 = vlaneseq
    %v271 = vshrl.u32 %v270, 7
    %v272 = vsub.s32 1, %v271
    %v273 = vrot.slane %v102, %v272
    %v274 = vmul.f32 %v264, %v273
    %v275 = vmul.f32 %v268, %v273
    %v276 = vadd.f32 %v260, %v274
    %v277 = vadd.f32 %v261, %v275
    %278 = vset.pattern.permute.xlu0 10
    %279 = vperm.xlu0 %278, %v33
    %v280 = vpop.permute.xlu0 %279
    %282 = vset.pattern.permute.xlu0 10
    %283 = vperm.xlu0 %282, %v34
    %v284 = vpop.permute.xlu0 %283
    %v286 = vlaneseq
    %v287 = vshrl.u32 %v286, 7
    %v288 = vsub.s32 2, %v287
    %v289 = vrot.slane %v102, %v288
    %v290 = vmul.f32 %v280, %v289
    %v291 = vmul.f32 %v284, %v289
    %v292 = vadd.f32 %v276, %v290
    %v293 = vadd.f32 %v277, %v291
    %294 = vset.pattern.permute.xlu0 11
    %295 = vperm.xlu0 %294, %v33
    %v296 = vpop.permute.xlu0 %295
    %298 = vset.pattern.permute.xlu0 11
    %299 = vperm.xlu0 %298, %v34
    %v300 = vpop.permute.xlu0 %299
    %v302 = vlaneseq
    %v303 = vshrl.u32 %v302, 7
    %v304 = vsub.s32 3, %v303
    %v305 = vrot.slane %v102, %v304
    %v306 = vmul.f32 %v296, %v305
    %v307 = vmul.f32 %v300, %v305
    %v308 = vadd.f32 %v292, %v306
    %v309 = vadd.f32 %v293, %v307
    %310 = vset.pattern.permute.xlu0 12
    %311 = vperm.xlu0 %310, %v33
    %v312 = vpop.permute.xlu0 %311
    %314 = vset.pattern.permute.xlu0 12
    %315 = vperm.xlu0 %314, %v34
    %v316 = vpop.permute.xlu0 %315
    %v318 = vlaneseq
    %v319 = vshrl.u32 %v318, 7
    %v320 = vsub.s32 4, %v319
    %v321 = vrot.slane %v102, %v320
    %v322 = vmul.f32 %v312, %v321
    %v323 = vmul.f32 %v316, %v321
    %v324 = vadd.f32 %v308, %v322
    %v325 = vadd.f32 %v309, %v323
    %326 = vset.pattern.permute.xlu0 13
    %327 = vperm.xlu0 %326, %v33
    %v328 = vpop.permute.xlu0 %327
    %330 = vset.pattern.permute.xlu0 13
    %331 = vperm.xlu0 %330, %v34
    %v332 = vpop.permute.xlu0 %331
    %v334 = vlaneseq
    %v335 = vshrl.u32 %v334, 7
    %v336 = vsub.s32 5, %v335
    %v337 = vrot.slane %v102, %v336
    %v338 = vmul.f32 %v328, %v337
    %v339 = vmul.f32 %v332, %v337
    %v340 = vadd.f32 %v324, %v338
    %v341 = vadd.f32 %v325, %v339
    %342 = vset.pattern.permute.xlu0 14
    %343 = vperm.xlu0 %342, %v33
    %v344 = vpop.permute.xlu0 %343
    %346 = vset.pattern.permute.xlu0 14
    %347 = vperm.xlu0 %346, %v34
    %v348 = vpop.permute.xlu0 %347
    %v350 = vlaneseq
    %v351 = vshrl.u32 %v350, 7
    %v352 = vsub.s32 6, %v351
    %v353 = vrot.slane %v102, %v352
    %v354 = vmul.f32 %v344, %v353
    %v355 = vmul.f32 %v348, %v353
    %v356 = vadd.f32 %v340, %v354
    %v357 = vadd.f32 %v341, %v355
    %358 = vset.pattern.permute.xlu0 15
    %359 = vperm.xlu0 %358, %v33
    %v360 = vpop.permute.xlu0 %359
    %362 = vset.pattern.permute.xlu0 15
    %363 = vperm.xlu0 %362, %v34
    %v364 = vpop.permute.xlu0 %363
    %v366 = vlaneseq
    %v367 = vshrl.u32 %v366, 7
    %v368 = vsub.s32 7, %v367
    %v369 = vrot.slane %v102, %v368
    %v370 = vmul.f32 %v360, %v369
    %v371 = vmul.f32 %v364, %v369
    %v372 = vadd.f32 %v356, %v370
    %v373 = vadd.f32 %v357, %v371
    %374 = vset.pattern.permute.xlu0 16
    %375 = vperm.xlu0 %374, %v33
    %v376 = vpop.permute.xlu0 %375
    %378 = vset.pattern.permute.xlu0 16
    %379 = vperm.xlu0 %378, %v34
    %v380 = vpop.permute.xlu0 %379
    %v382 = vlaneseq
    %v383 = vshrl.u32 %v382, 7
    %v384 = vsub.s32 0, %v383
    %v385 = vrot.slane %v103, %v384
    %v386 = vmul.f32 %v376, %v385
    %v387 = vmul.f32 %v380, %v385
    %v388 = vadd.f32 %v372, %v386
    %v389 = vadd.f32 %v373, %v387
    %390 = vset.pattern.permute.xlu0 17
    %391 = vperm.xlu0 %390, %v33
    %v392 = vpop.permute.xlu0 %391
    %394 = vset.pattern.permute.xlu0 17
    %395 = vperm.xlu0 %394, %v34
    %v396 = vpop.permute.xlu0 %395
    %v398 = vlaneseq
    %v399 = vshrl.u32 %v398, 7
    %v400 = vsub.s32 1, %v399
    %v401 = vrot.slane %v103, %v400
    %v402 = vmul.f32 %v392, %v401
    %v403 = vmul.f32 %v396, %v401
    %v404 = vadd.f32 %v388, %v402
    %v405 = vadd.f32 %v389, %v403
    %406 = vset.pattern.permute.xlu0 18
    %407 = vperm.xlu0 %406, %v33
    %v408 = vpop.permute.xlu0 %407
    %410 = vset.pattern.permute.xlu0 18
    %411 = vperm.xlu0 %410, %v34
    %v412 = vpop.permute.xlu0 %411
    %v414 = vlaneseq
    %v415 = vshrl.u32 %v414, 7
    %v416 = vsub.s32 2, %v415
    %v417 = vrot.slane %v103, %v416
    %v418 = vmul.f32 %v408, %v417
    %v419 = vmul.f32 %v412, %v417
    %v420 = vadd.f32 %v404, %v418
    %v421 = vadd.f32 %v405, %v419
    %422 = vset.pattern.permute.xlu0 19
    %423 = vperm.xlu0 %422, %v33
    %v424 = vpop.permute.xlu0 %423
    %426 = vset.pattern.permute.xlu0 19
    %427 = vperm.xlu0 %426, %v34
    %v428 = vpop.permute.xlu0 %427
    %v430 = vlaneseq
    %v431 = vshrl.u32 %v430, 7
    %v432 = vsub.s32 3, %v431
    %v433 = vrot.slane %v103, %v432
    %v434 = vmul.f32 %v424, %v433
    %v435 = vmul.f32 %v428, %v433
    %v436 = vadd.f32 %v420, %v434
    %v437 = vadd.f32 %v421, %v435
    %v438 = vmax.f32 %v436, 0.0
    %v439 = vmax.f32 %v437, 0.0
    %v440 = vld [vmem:[#allocation2] sm:$0x1]
    %442 = vset.pattern.permute.xlu0 0
    %443 = vperm.xlu0 %442, %v440
    %v444 = vpop.permute.xlu0 %443
    %v446 = vlaneseq
    %v447 = vshrl.u32 %v446, 7
    %v448 = vsub.s32 0, %v447
    %v449 = vrot.slane %v444, %v448
    %451 = vset.pattern.permute.xlu0 0
    %452 = vperm.xlu0 %451, %v35
    %v453 = vpop.permute.xlu0 %452
    %v455 = vlaneseq
    %v456 = vshrl.u32 %v455, 7
    %v457 = vsub.s32 0, %v456
    %v458 = vrot.slane %v453, %v457
    %v459 = vmul.f32 %v458, %v438
    %v460 = vadd.f32 %v449, %v459
    %461 = vset.pattern.permute.xlu0 1
    %462 = vperm.xlu0 %461, %v35
    %v463 = vpop.permute.xlu0 %462
    %v465 = vlaneseq
    %v466 = vshrl.u32 %v465, 7
    %v467 = vsub.s32 0, %v466
    %v468 = vrot.slane %v463, %v467
    %v469 = vmul.f32 %v468, %v438
    %v471 = vrot.slane %v469, 1
    %v473 = vadd.f32 %v460, %v471
    %474 = vset.pattern.permute.xlu0 2
    %475 = vperm.xlu0 %474, %v35
    %v476 = vpop.permute.xlu0 %475
    %v478 = vlaneseq
    %v479 = vshrl.u32 %v478, 7
    %v480 = vsub.s32 0, %v479
    %v481 = vrot.slane %v476, %v480
    %v482 = vmul.f32 %v481, %v438
    %v484 = vrot.slane %v482, 2
    %v486 = vadd.f32 %v473, %v484
    %487 = vset.pattern.permute.xlu0 3
    %488 = vperm.xlu0 %487, %v35
    %v489 = vpop.permute.xlu0 %488
    %v491 = vlaneseq
    %v492 = vshrl.u32 %v491, 7
    %v493 = vsub.s32 0, %v492
    %v494 = vrot.slane %v489, %v493
    %v495 = vmul.f32 %v494, %v438
    %v497 = vrot.slane %v495, 3
    %v499 = vadd.f32 %v486, %v497
    %500 = vset.pattern.permute.xlu0 4
    %501 = vperm.xlu0 %500, %v35
    %v502 = vpop.permute.xlu0 %501
    %v504 = vlaneseq
    %v505 = vshrl.u32 %v504, 7
    %v506 = vsub.s32 0, %v505
    %v507 = vrot.slane %v502, %v506
    %v508 = vmul.f32 %v507, %v438
    %v510 = vrot.slane %v508, 4
    %v512 = vadd.f32 %v499, %v510
    %513 = vset.pattern.permute.xlu0 5
    %514 = vperm.xlu0 %513, %v35
    %v515 = vpop.permute.xlu0 %514
    %v517 = vlaneseq
    %v518 = vshrl.u32 %v517, 7
    %v519 = vsub.s32 0, %v518
    %v520 = vrot.slane %v515, %v519
    %v521 = vmul.f32 %v520, %v438
    %v523 = vrot.slane %v521, 5
    %v525 = vadd.f32 %v512, %v523
    %526 = vset.pattern.permute.xlu0 6
    %527 = vperm.xlu0 %526, %v35
    %v528 = vpop.permute.xlu0 %527
    %v530 = vlaneseq
    %v531 = vshrl.u32 %v530, 7
    %v532 = vsub.s32 0, %v531
    %v533 = vrot.slane %v528, %v532
    %v534 = vmul.f32 %v533, %v438
    %v536 = vrot.slane %v534, 6
    %v538 = vadd.f32 %v525, %v536
    %539 = vset.pattern.permute.xlu0 7
    %540 = vperm.xlu0 %539, %v35
    %v541 = vpop.permute.xlu0 %540
    %v543 = vlaneseq
    %v544 = vshrl.u32 %v543, 7
    %v545 = vsub.s32 0, %v544
    %v546 = vrot.slane %v541, %v545
    %v547 = vmul.f32 %v546, %v438
    %v549 = vrot.slane %v547, 7
    %v551 = vadd.f32 %v538, %v549
    %552 = vset.pattern.permute.xlu0 8
    %553 = vperm.xlu0 %552, %v35
    %v554 = vpop.permute.xlu0 %553
    %v556 = vlaneseq
    %v557 = vshrl.u32 %v556, 7
    %v558 = vsub.s32 0, %v557
    %v559 = vrot.slane %v554, %v558
    %v560 = vmul.f32 %v559, %v439
    %v561 = vadd.f32 %v551, %v560
    %562 = vset.pattern.permute.xlu0 9
    %563 = vperm.xlu0 %562, %v35
    %v564 = vpop.permute.xlu0 %563
    %v566 = vlaneseq
    %v567 = vshrl.u32 %v566, 7
    %v568 = vsub.s32 0, %v567
    %v569 = vrot.slane %v564, %v568
    %v570 = vmul.f32 %v569, %v439
    %v572 = vrot.slane %v570, 1
    %v574 = vadd.f32 %v561, %v572
    %575 = vst [vmem:[#allocation3] sm:$0x1] %v574
    // Predicated region
    $region30: #{tpu_custom_call.1} parent=1 // pred_check
      _
    $region31: #{tpu_custom_call.1} parent=1 // pred_check_branch
      %577 = sbr.rel (0) target = $region33
    $region32: #{tpu_custom_call.1} parent=1 // pred_region
      %s579 = ssub.s32 16, 16
      %580 = vsyncadd [#allocation4], %s579
      %s582 = sshll.u32 [#allocation3], 4
      %s583 = int_to_ptr.vmem [resolvable:$true] %s582
      %585 = dma.vmem_to_hbm [thread:$0]  %s583, 16, %s7, [#allocation4]
    $region33: #{tpu_custom_call.1} parent=1 // pred_fallthru
      _
    // Predicated region
    $region34: #{tpu_custom_call.1} parent=1 // pred_check
      _
    $region35: #{tpu_custom_call.1} parent=1 // pred_check_branch
      %587 = sbr.rel (0) target = $region37
    $region36: #{tpu_custom_call.1} parent=1 // pred_region
      %588 = dma.done [#allocation4], 16
    $region37: #{tpu_custom_call.1} parent=1 // pred_fallthru
      _
    %589 = vsyncpa [#allocation4], 1

</llo_original>
